<compile_context>
chip_gen: v6e
topology: v6e:2x2x1
jax: 0.10.0
libtpu: 0.0.40
codegen_flags: <defaults>
</compile_context>

<pallas_src>
import functools

import jax
import jax.numpy as jnp
from jax.experimental import pallas as pl
from jax.experimental.pallas import tpu as pltpu


def _round_up(n, m):
    return ((n + m - 1) // m) * m


# --------------------------------------------------------------------------
# Kernels
# --------------------------------------------------------------------------
def _accumulate_stats(stats_ref, h, i, *, rows, bt, need_mask):
    """stats_ref: (2, N) resident accumulator; row 0 = sum, row 1 = sum of squares."""
    if need_mask:
        # Exclude zero-padded batch rows from the BatchNorm statistics.
        row_ids = jax.lax.broadcasted_iota(jnp.int32, h.shape, 0) + i * bt
        h = jnp.where(row_ids < rows, h, 0.0)
    upd = jnp.concatenate(
        [jnp.sum(h, axis=0, keepdims=True),
         jnp.sum(h * h, axis=0, keepdims=True)], axis=0)

    @pl.when(i == 0)
    def _():
        stats_ref[...] = upd

    @pl.when(i > 0)
    def _():
        stats_ref[...] = stats_ref[...] + upd


def _fc1_kernel(x_ref, w1_ref, bn1_ref, h1_ref, stats_ref, *, rows, bt, need_mask):
    """h1 = relu(x @ w1 + b1); stream batch sum / sumsq of h1 for BN1."""
    i = pl.program_id(0)
    h = jnp.dot(x_ref[...], w1_ref[...], preferred_element_type=jnp.float32)
    h = jnp.maximum(h + bn1_ref[0:1, :], 0.0)          # bn1 row 0 = b1
    h1_ref[...] = h
    _accumulate_stats(stats_ref, h, i, rows=rows, bt=bt, need_mask=need_mask)


def _fc2_kernel(h1_ref, w2_ref, aff1_ref, bn2_ref, h2_ref, stats_ref, *,
                rows, bt, need_mask):
    """h2 = relu(bn1(h1) @ w2 + b2); stream batch sum / sumsq of h2 for BN2."""
    i = pl.program_id(0)
    h1n = h1_ref[...] * aff1_ref[0:1, :] + aff1_ref[1:2, :]     # BN1 affine in f32
    h = jnp.dot(h1n.astype(jnp.bfloat16), w2_ref[...],          # bf16 x bf16 on MXU
                preferred_element_type=jnp.float32)
    h = jnp.maximum(h + bn2_ref[0:1, :], 0.0)                   # bn2 row 0 = b2
    h2_ref[...] = h
    _accumulate_stats(stats_ref, h, i, rows=rows, bt=bt, need_mask=need_mask)


def _bn_apply_kernel(h2_ref, aff2_ref, o_ref):
    """out = h2 * scale2 + shift2 (BN2 with batch stats folded into scale/shift)."""
    o_ref[...] = (h2_ref[...] * aff2_ref[0:1, :] + aff2_ref[1:2, :]).astype(o_ref.dtype)


# --------------------------------------------------------------------------
# Forward wrapper
# --------------------------------------------------------------------------
@functools.partial(jax.jit, static_argnames=("eps",))
def facegrid_forward(x, params, *, eps):
    """x: (B, C, H, W) or (B, F). Returns (B, 128) float32."""
    w1, bn1, w2, bn2 = params
    k_pad, d1 = w1.shape            # 640, 256 (contraction dim pre-padded to 5*128)
    d2 = w2.shape[1]                # 128
    B = x.shape[0]

    # Flatten / pad / cast glue -- all fused under the enclosing jit.
    x2d = x.reshape(B, -1)          # x.view(x.size(0), -1)
    bt = min(512, _round_up(B, 8))  # batch tile, sublane aligned
    b_pad = _round_up(B, bt)
    nbt = b_pad // bt
    need_mask = b_pad != B          # padded rows must be excluded from BN stats
    x2d = jnp.pad(x2d, ((0, b_pad - B), (0, k_pad - x2d.shape[1]))).astype(jnp.bfloat16)

    def resident(shape):            # pinned in VMEM across the whole batch grid
        return pl.BlockSpec(shape, lambda i: (0, 0))

    def streamed(shape):            # one batch tile per grid step
        return pl.BlockSpec(shape, lambda i: (i, 0))

    arb = pltpu.CompilerParams(dimension_semantics=("arbitrary",))

    # ---- Pass 1: Linear(640->256) + ReLU, streaming BN1 statistics ----
    cost1 = pl.CostEstimate(
        flops=2 * b_pad * k_pad * d1, transcendentals=0,
        bytes_accessed=b_pad * k_pad * 2 + k_pad * d1 * 2 + b_pad * d1 * 4 + 5 * d1 * 4)
    h1, stats1 = pl.pallas_call(
        functools.partial(_fc1_kernel, rows=B, bt=bt, need_mask=need_mask),
        grid=(nbt,),
        in_specs=[streamed((bt, k_pad)), resident((k_pad, d1)), resident((3, d1))],
        out_specs=(streamed((bt, d1)), resident((2, d1))),
        out_shape=(jax.ShapeDtypeStruct((b_pad, d1), jnp.float32),
                   jax.ShapeDtypeStruct((2, d1), jnp.float32)),
        compiler_params=arb,
        cost_estimate=cost1,
    )(x2d, w1, bn1)

    # BN finalize (tiny, fused by XLA): one-pass stats -> packed scale/shift (2, N).
    def bn_affine(stats, g, be):
        mean = stats[0:1, :] / B
        var = stats[1:2, :] / B - mean * mean          # biased variance (training mode)
        scale = g * jax.lax.rsqrt(var + eps)
        shift = be - mean * scale
        return jnp.concatenate([scale, shift], axis=0)

    aff1 = bn_affine(stats1, bn1[1:2, :], bn1[2:3, :])

    # ---- Pass 2: BN1 affine + Linear(256->128) + ReLU, streaming BN2 stats ----
    cost2 = pl.CostEstimate(
        flops=2 * b_pad * d1 * d2 + 2 * b_pad * d1, transcendentals=0,
        bytes_accessed=b_pad * d1 * 4 + d1 * d2 * 2 + b_pad * d2 * 4 + (2 * d1 + 5 * d2) * 4)
    h2, stats2 = pl.pallas_call(
        functools.partial(_fc2_kernel, rows=B, bt=bt, need_mask=need_mask),
        grid=(nbt,),
        in_specs=[streamed((bt, d1)), resident((d1, d2)), resident((2, d1)),
                  resident((3, d2))],
        out_specs=(streamed((bt, d2)), resident((2, d2))),
        out_shape=(jax.ShapeDtypeStruct((b_pad, d2), jnp.float32),
                   jax.ShapeDtypeStruct((2, d2), jnp.float32)),
        compiler_params=arb,
        cost_estimate=cost2,
    )(h1, w2, aff1, bn2)

    aff2 = bn_affine(stats2, bn2[1:2, :], bn2[2:3, :])

    # ---- Pass 3: apply BN2 affine (truly batch-parallel elementwise) ----
    out = pl.pallas_call(
        _bn_apply_kernel,
        grid=(nbt,),
        in_specs=[streamed((bt, d2)), resident((2, d2))],
        out_specs=streamed((bt, d2)),
        out_shape=jax.ShapeDtypeStruct((b_pad, d2), jnp.float32),
        compiler_params=pltpu.CompilerParams(dimension_semantics=("parallel",)),
    )(h2, aff2)

    return out[:B]


# --------------------------------------------------------------------------
# Parameters / reference
# --------------------------------------------------------------------------
def init_params(key, grid_size=25):
    """Synthetic params matching the PyTorch layer shapes.

    Weights are stored bf16 (weight DMA dominates at small B) with w1
    zero-padded along the contraction dim to 640 = 5*128.  Per-feature
    vectors are packed lane-dense: bn1=(3,256)=[b1;g1;be1], bn2=(3,128)=[b2;g2;be2].
    """
    in_f = grid_size * grid_size                 # 625
    k_pad = _round_up(in_f, 128)                 # 640
    k1, k2, k3, k4, k5, k6 = jax.random.split(key, 6)

    def lin_init(k, fan_in, fan_out):
        bound = 1.0 / jnp.sqrt(fan_in)
        kw, kb = jax.random.split(k)
        w = jax.random.uniform(kw, (fan_in, fan_out), jnp.float32, -bound, bound)
        b = jax.random.uniform(kb, (1, fan_out), jnp.float32, -bound, bound)
        return w, b

    w1, b1 = lin_init(k1, in_f, 256)
    w2, b2 = lin_init(k2, 256, 128)
    w1 = jnp.pad(w1, ((0, k_pad - in_f), (0, 0))).astype(jnp.bfloat16)
    w2 = w2.astype(jnp.bfloat16)

    # BatchNorm affine params: gamma~1, beta~0 with small perturbations so the
    # affine path is actually exercised.
    g1 = 1.0 + 0.01 * jax.random.normal(k3, (1, 256), jnp.float32)
    be1 = 0.01 * jax.random.normal(k4, (1, 256), jnp.float32)
    g2 = 1.0 + 0.01 * jax.random.normal(k5, (1, 128), jnp.float32)
    be2 = 0.01 * jax.random.normal(k6, (1, 128), jnp.float32)

    bn1 = jnp.concatenate([b1, g1, be1], axis=0)     # (3, 256)
    bn2 = jnp.concatenate([b2, g2, be2], axis=0)     # (3, 128)
    return (w1, bn1, w2, bn2)


def reference_forward(x, params, *, eps):
    """Pure-JAX reference: same dtype policy (bf16 weights / bf16 matmul LHS),
    but untiled, unpacked and with two-pass batch statistics."""
    w1, bn1, w2, bn2 = params
    b1, g1, be1 = bn1[0:1], bn1[1:2], bn1[2:3]
    b2, g2, be2 = bn2[0:1], bn2[1:2], bn2[2:3]
    x2d = x.reshape(x.shape[0], -1).astype(jnp.float32)
    x2d = jnp.pad(x2d, ((0, 0), (0, w1.shape[0] - x2d.shape[1])))

    h = jnp.dot(x2d.astype(jnp.bfloat16), w1, preferred_element_type=jnp.float32)
    h = jnp.maximum(h + b1, 0.0)
    m, v = h.mean(0, keepdims=True), h.var(0, keepdims=True)
    hn = (h - m) * jax.lax.rsqrt(v + eps) * g1 + be1

    h2 = jnp.dot(hn.astype(jnp.bfloat16), w2, preferred_element_type=jnp.float32)
    h2 = jnp.maximum(h2 + b2, 0.0)
    m2, v2 = h2.mean(0, keepdims=True), h2.var(0, keepdims=True)
    return (h2 - m2) * jax.lax.rsqrt(v2 + eps) * g2 + be2


if __name__ == "__main__":
    key = jax.random.PRNGKey(0)
    kx, kp = jax.random.split(key)

    grid_size = 25
    bn_momentum = 0.01          # passed positionally as eps in the PyTorch module
    batch = 8

    # Face-grid input: binary occupancy map (B, 1, 25, 25); forward flattens to (B, 625).
    x = (jax.random.uniform(kx, (batch, 1, grid_size, grid_size)) > 0.7).astype(jnp.float32)
    params = init_params(kp, grid_size)

    out = facegrid_forward(x, params, eps=bn_momentum)
    out = jax.block_until_ready(out)

    ref = reference_forward(x, params, eps=bn_momentum)
    assert out.shape == (batch, 128), out.shape
    assert jnp.allclose(out, ref, atol=1e-3, rtol=1e-3), float(jnp.max(jnp.abs(out - ref)))

    print("KERNEL_OK")
</pallas_src>

<mosaic_0001>
module attributes {stable_mosaic.version = 11 : i64} {
  func.func @_fc1_kernel(%arg0: i32, %arg1: memref<8x640xbf16, #tpu.memory_space<vmem>>, %arg2: memref<640x256xbf16, #tpu.memory_space<vmem>>, %arg3: memref<3x256xf32, #tpu.memory_space<vmem>>, %arg4: memref<8x256xf32, #tpu.memory_space<vmem>>, %arg5: memref<2x256xf32, #tpu.memory_space<vmem>>) attributes {dimension_semantics = [#tpu.dimension_semantics<arbitrary>], iteration_bounds = array<i64: 1>, scalar_prefetch = 0 : i64, scratch_operands = 0 : i64, tpu.core_type = #tpu.core_type<tc>, window_params = [{transform_indices = @transform_0, window_bounds = array<i64: 8, 640>}, {pipeline_mode = #tpu.pipeline_mode<synchronous>, transform_indices = @transform_1, window_bounds = array<i64: 640, 256>}, {pipeline_mode = #tpu.pipeline_mode<synchronous>, transform_indices = @transform_2, window_bounds = array<i64: 3, 256>}, {transform_indices = @transform_3, window_bounds = array<i64: 8, 256>}, {pipeline_mode = #tpu.pipeline_mode<synchronous>, transform_indices = @transform_4, window_bounds = array<i64: 2, 256>}]} {
    %c0 = arith.constant 0 : index
    %c0_0 = arith.constant 0 : index
    %0 = vector.load %arg1[%c0, %c0_0] : memref<8x640xbf16, #tpu.memory_space<vmem>>, vector<8x640xbf16>
    %c0_1 = arith.constant 0 : index
    %c0_2 = arith.constant 0 : index
    %1 = vector.load %arg2[%c0_1, %c0_2] : memref<640x256xbf16, #tpu.memory_space<vmem>>, vector<640x256xbf16>
    %cst = arith.constant dense<0.000000e+00> : vector<8x256xf32>
    %2 = tpu.matmul %0, %1, %cst {dimension_numbers = #tpu.dot_dimension_numbers<[1], [0], [0], [1], [0, 0, 1, 1], [], []>} : vector<8x640xbf16>, vector<640x256xbf16>, vector<8x256xf32> -> vector<8x256xf32>
    %c0_3 = arith.constant 0 : index
    %c0_4 = arith.constant 0 : index
    %3 = vector.load %arg3[%c0_3, %c0_4] : memref<3x256xf32, #tpu.memory_space<vmem>>, vector<1x256xf32>
    %4 = vector.broadcast %3 : vector<1x256xf32> to vector<8x256xf32>
    %5 = arith.addf %2, %4 : vector<8x256xf32>
    %cst_5 = arith.constant 0.000000e+00 : f32
    %6 = vector.broadcast %cst_5 : f32 to vector<8x256xf32>
    %7 = arith.maximumf %5, %6 : vector<8x256xf32>
    %c0_6 = arith.constant 0 : index
    %c0_7 = arith.constant 0 : index
    %8 = vector.load %arg4[%c0_6, %c0_7] : memref<8x256xf32, #tpu.memory_space<vmem>>, vector<8x256xf32>
    tpu.vector_store %arg4[%c0_6, %c0_7], %7 {strides = array<i32>} : memref<8x256xf32, #tpu.memory_space<vmem>>, vector<8x256xf32>,
    %cst_8 = arith.constant dense<0.000000e+00> : vector<256xf32>
    %9 = vector.multi_reduction <add>, %7, %cst_8 [0] : vector<8x256xf32> to vector<256xf32>
    %10 = vector.shape_cast %9 : vector<256xf32> to vector<1x256xf32>
    %11 = arith.mulf %7, %7 : vector<8x256xf32>
    %cst_9 = arith.constant dense<0.000000e+00> : vector<256xf32>
    %12 = vector.multi_reduction <add>, %11, %cst_9 [0] : vector<8x256xf32> to vector<256xf32>
    %13 = vector.shape_cast %12 : vector<256xf32> to vector<1x256xf32>
    %14 = tpu.concatenate %10, %13 in 0 : vector<1x256xf32>, vector<1x256xf32> -> vector<2x256xf32>
    %c0_i32 = arith.constant 0 : i32
    %15 = arith.cmpi eq, %arg0, %c0_i32 : i32
    %16 = arith.extui %15 : i1 to i32
    %c0_i32_10 = arith.constant 0 : i32
    %17 = arith.cmpi ne, %16, %c0_i32_10 : i32
    scf.if %17 {
      %c0_13 = arith.constant 0 : index
      %c0_14 = arith.constant 0 : index
      %21 = vector.load %arg5[%c0_13, %c0_14] : memref<2x256xf32, #tpu.memory_space<vmem>>, vector<2x256xf32>
      tpu.vector_store %arg5[%c0_13, %c0_14], %14 {strides = array<i32>} : memref<2x256xf32, #tpu.memory_space<vmem>>, vector<2x256xf32>,
    } else {
    }
    %c0_i32_11 = arith.constant 0 : i32
    %18 = arith.cmpi sgt, %arg0, %c0_i32_11 : i32
    %19 = arith.extui %18 : i1 to i32
    %c0_i32_12 = arith.constant 0 : i32
    %20 = arith.cmpi ne, %19, %c0_i32_12 : i32
    scf.if %20 {
      %c0_13 = arith.constant 0 : index
      %c0_14 = arith.constant 0 : index
      %21 = vector.load %arg5[%c0_13, %c0_14] : memref<2x256xf32, #tpu.memory_space<vmem>>, vector<2x256xf32>
      %22 = arith.addf %21, %14 : vector<2x256xf32>
      %c0_15 = arith.constant 0 : index
      %c0_16 = arith.constant 0 : index
      %23 = vector.load %arg5[%c0_15, %c0_16] : memref<2x256xf32, #tpu.memory_space<vmem>>, vector<2x256xf32>
      tpu.vector_store %arg5[%c0_15, %c0_16], %22 {strides = array<i32>} : memref<2x256xf32, #tpu.memory_space<vmem>>, vector<2x256xf32>,
    } else {
    }
    return
  }
  func.func @transform_0(%arg0: i32) -> (i32, i32) {
    %c0_i32 = arith.constant 0 : i32
    %c0_i32_0 = arith.constant 0 : i32
    return %arg0, %c0_i32 : i32, i32
  }
  func.func @transform_1(%arg0: i32) -> (i32, i32) {
    %c0_i32 = arith.constant 0 : i32
    %c0_i32_0 = arith.constant 0 : i32
    %c0_i32_1 = arith.constant 0 : i32
    return %c0_i32, %c0_i32_0 : i32, i32
  }
  func.func @transform_2(%arg0: i32) -> (i32, i32) {
    %c0_i32 = arith.constant 0 : i32
    %c0_i32_0 = arith.constant 0 : i32
    %c0_i32_1 = arith.constant 0 : i32
    return %c0_i32, %c0_i32_0 : i32, i32
  }
  func.func @transform_3(%arg0: i32) -> (i32, i32) {
    %c0_i32 = arith.constant 0 : i32
    %c0_i32_0 = arith.constant 0 : i32
    return %arg0, %c0_i32 : i32, i32
  }
  func.func @transform_4(%arg0: i32) -> (i32, i32) {
    %c0_i32 = arith.constant 0 : i32
    %c0_i32_0 = arith.constant 0 : i32
    %c0_i32_1 = arith.constant 0 : i32
    return %c0_i32, %c0_i32_0 : i32, i32
  }
}

module attributes {stable_mosaic.version = 11 : i64} {
  func.func @_bn_apply_kernel(%arg0: i32, %arg1: memref<8x128xf32, #tpu.memory_space<vmem>>, %arg2: memref<2x128xf32, #tpu.memory_space<vmem>>, %arg3: memref<8x128xf32, #tpu.memory_space<vmem>>) attributes {dimension_semantics = [#tpu.dimension_semantics<parallel>], iteration_bounds = array<i64: 1>, scalar_prefetch = 0 : i64, scratch_operands = 0 : i64, tpu.core_type = #tpu.core_type<tc>, window_params = [{transform_indices = @transform_0, window_bounds = array<i64: 8, 128>}, {pipeline_mode = #tpu.pipeline_mode<synchronous>, transform_indices = @transform_1, window_bounds = array<i64: 2, 128>}, {transform_indices = @transform_2, window_bounds = array<i64: 8, 128>}]} {
    %c0 = arith.constant 0 : index
    %c0_0 = arith.constant 0 : index
    %0 = vector.load %arg1[%c0, %c0_0] : memref<8x128xf32, #tpu.memory_space<vmem>>, vector<8x128xf32>
    %c0_1 = arith.constant 0 : index
    %c0_2 = arith.constant 0 : index
    %1 = vector.load %arg2[%c0_1, %c0_2] : memref<2x128xf32, #tpu.memory_space<vmem>>, vector<1x128xf32>
    %2 = vector.broadcast %1 : vector<1x128xf32> to vector<8x128xf32>
    %3 = arith.mulf %0, %2 : vector<8x128xf32>
    %c1 = arith.constant 1 : index
    %c0_3 = arith.constant 0 : index
    %4 = vector.load %arg2[%c1, %c0_3] : memref<2x128xf32, #tpu.memory_space<vmem>>, vector<1x128xf32>
    %5 = vector.broadcast %4 : vector<1x128xf32> to vector<8x128xf32>
    %6 = arith.addf %3, %5 : vector<8x128xf32>
    %c0_4 = arith.constant 0 : index
    %c0_5 = arith.constant 0 : index
    %7 = vector.load %arg3[%c0_4, %c0_5] : memref<8x128xf32, #tpu.memory_space<vmem>>, vector<8x128xf32>
    tpu.vector_store %arg3[%c0_4, %c0_5], %6 {strides = array<i32>} : memref<8x128xf32, #tpu.memory_space<vmem>>, vector<8x128xf32>,
    return
  }
  func.func @transform_0(%arg0: i32) -> (i32, i32) {
    %c0_i32 = arith.constant 0 : i32
    %c0_i32_0 = arith.constant 0 : i32
    return %arg0, %c0_i32 : i32, i32
  }
  func.func @transform_1(%arg0: i32) -> (i32, i32) {
    %c0_i32 = arith.constant 0 : i32
    %c0_i32_0 = arith.constant 0 : i32
    %c0_i32_1 = arith.constant 0 : i32
    return %c0_i32, %c0_i32_0 : i32, i32
  }
  func.func @transform_2(%arg0: i32) -> (i32, i32) {
    %c0_i32 = arith.constant 0 : i32
    %c0_i32_0 = arith.constant 0 : i32
    return %arg0, %c0_i32 : i32, i32
  }
}

module attributes {stable_mosaic.version = 11 : i64} {
  func.func @_fc2_kernel(%arg0: i32, %arg1: memref<8x256xf32, #tpu.memory_space<vmem>>, %arg2: memref<256x128xbf16, #tpu.memory_space<vmem>>, %arg3: memref<2x256xf32, #tpu.memory_space<vmem>>, %arg4: memref<3x128xf32, #tpu.memory_space<vmem>>, %arg5: memref<8x128xf32, #tpu.memory_space<vmem>>, %arg6: memref<2x128xf32, #tpu.memory_space<vmem>>) attributes {dimension_semantics = [#tpu.dimension_semantics<arbitrary>], iteration_bounds = array<i64: 1>, scalar_prefetch = 0 : i64, scratch_operands = 0 : i64, tpu.core_type = #tpu.core_type<tc>, window_params = [{transform_indices = @transform_0, window_bounds = array<i64: 8, 256>}, {pipeline_mode = #tpu.pipeline_mode<synchronous>, transform_indices = @transform_1, window_bounds = array<i64: 256, 128>}, {pipeline_mode = #tpu.pipeline_mode<synchronous>, transform_indices = @transform_2, window_bounds = array<i64: 2, 256>}, {pipeline_mode = #tpu.pipeline_mode<synchronous>, transform_indices = @transform_3, window_bounds = array<i64: 3, 128>}, {transform_indices = @transform_4, window_bounds = array<i64: 8, 128>}, {pipeline_mode = #tpu.pipeline_mode<synchronous>, transform_indices = @transform_5, window_bounds = array<i64: 2, 128>}]} {
    %c0 = arith.constant 0 : index
    %c0_0 = arith.constant 0 : index
    %0 = vector.load %arg1[%c0, %c0_0] : memref<8x256xf32, #tpu.memory_space<vmem>>, vector<8x256xf32>
    %c0_1 = arith.constant 0 : index
    %c0_2 = arith.constant 0 : index
    %1 = vector.load %arg3[%c0_1, %c0_2] : memref<2x256xf32, #tpu.memory_space<vmem>>, vector<1x256xf32>
    %2 = vector.broadcast %1 : vector<1x256xf32> to vector<8x256xf32>
    %3 = arith.mulf %0, %2 : vector<8x256xf32>
    %c1 = arith.constant 1 : index
    %c0_3 = arith.constant 0 : index
    %4 = vector.load %arg3[%c1, %c0_3] : memref<2x256xf32, #tpu.memory_space<vmem>>, vector<1x256xf32>
    %5 = vector.broadcast %4 : vector<1x256xf32> to vector<8x256xf32>
    %6 = arith.addf %3, %5 : vector<8x256xf32>
    %7 = arith.truncf %6 : vector<8x256xf32> to vector<8x256xbf16>
    %c0_4 = arith.constant 0 : index
    %c0_5 = arith.constant 0 : index
    %8 = vector.load %arg2[%c0_4, %c0_5] : memref<256x128xbf16, #tpu.memory_space<vmem>>, vector<256x128xbf16>
    %cst = arith.constant dense<0.000000e+00> : vector<8x128xf32>
    %9 = tpu.matmul %7, %8, %cst {dimension_numbers = #tpu.dot_dimension_numbers<[1], [0], [0], [1], [0, 0, 1, 1], [], []>} : vector<8x256xbf16>, vector<256x128xbf16>, vector<8x128xf32> -> vector<8x128xf32>
    %c0_6 = arith.constant 0 : index
    %c0_7 = arith.constant 0 : index
    %10 = vector.load %arg4[%c0_6, %c0_7] : memref<3x128xf32, #tpu.memory_space<vmem>>, vector<1x128xf32>
    %11 = vector.broadcast %10 : vector<1x128xf32> to vector<8x128xf32>
    %12 = arith.addf %9, %11 : vector<8x128xf32>
    %cst_8 = arith.constant 0.000000e+00 : f32
    %13 = vector.broadcast %cst_8 : f32 to vector<8x128xf32>
    %14 = arith.maximumf %12, %13 : vector<8x128xf32>
    %c0_9 = arith.constant 0 : index
    %c0_10 = arith.constant 0 : index
    %15 = vector.load %arg5[%c0_9, %c0_10] : memref<8x128xf32, #tpu.memory_space<vmem>>, vector<8x128xf32>
    tpu.vector_store %arg5[%c0_9, %c0_10], %14 {strides = array<i32>} : memref<8x128xf32, #tpu.memory_space<vmem>>, vector<8x128xf32>,
    %cst_11 = arith.constant dense<0.000000e+00> : vector<128xf32>
    %16 = vector.multi_reduction <add>, %14, %cst_11 [0] : vector<8x128xf32> to vector<128xf32>
    %17 = vector.shape_cast %16 : vector<128xf32> to vector<1x128xf32>
    %18 = arith.mulf %14, %14 : vector<8x128xf32>
    %cst_12 = arith.constant dense<0.000000e+00> : vector<128xf32>
    %19 = vector.multi_reduction <add>, %18, %cst_12 [0] : vector<8x128xf32> to vector<128xf32>
    %20 = vector.shape_cast %19 : vector<128xf32> to vector<1x128xf32>
    %21 = tpu.concatenate %17, %20 in 0 : vector<1x128xf32>, vector<1x128xf32> -> vector<2x128xf32>
    %c0_i32 = arith.constant 0 : i32
    %22 = arith.cmpi eq, %arg0, %c0_i32 : i32
    %23 = arith.extui %22 : i1 to i32
    %c0_i32_13 = arith.constant 0 : i32
    %24 = arith.cmpi ne, %23, %c0_i32_13 : i32
    scf.if %24 {
      %c0_16 = arith.constant 0 : index
      %c0_17 = arith.constant 0 : index
      %28 = vector.load %arg6[%c0_16, %c0_17] : memref<2x128xf32, #tpu.memory_space<vmem>>, vector<2x128xf32>
      tpu.vector_store %arg6[%c0_16, %c0_17], %21 {strides = array<i32>} : memref<2x128xf32, #tpu.memory_space<vmem>>, vector<2x128xf32>,
    } else {
    }
    %c0_i32_14 = arith.constant 0 : i32
    %25 = arith.cmpi sgt, %arg0, %c0_i32_14 : i32
    %26 = arith.extui %25 : i1 to i32
    %c0_i32_15 = arith.constant 0 : i32
    %27 = arith.cmpi ne, %26, %c0_i32_15 : i32
    scf.if %27 {
      %c0_16 = arith.constant 0 : index
      %c0_17 = arith.constant 0 : index
      %28 = vector.load %arg6[%c0_16, %c0_17] : memref<2x128xf32, #tpu.memory_space<vmem>>, vector<2x128xf32>
      %29 = arith.addf %28, %21 : vector<2x128xf32>
      %c0_18 = arith.constant 0 : index
      %c0_19 = arith.constant 0 : index
      %30 = vector.load %arg6[%c0_18, %c0_19] : memref<2x128xf32, #tpu.memory_space<vmem>>, vector<2x128xf32>
      tpu.vector_store %arg6[%c0_18, %c0_19], %29 {strides = array<i32>} : memref<2x128xf32, #tpu.memory_space<vmem>>, vector<2x128xf32>,
    } else {
    }
    return
  }
  func.func @transform_0(%arg0: i32) -> (i32, i32) {
    %c0_i32 = arith.constant 0 : i32
    %c0_i32_0 = arith.constant 0 : i32
    return %arg0, %c0_i32 : i32, i32
  }
  func.func @transform_1(%arg0: i32) -> (i32, i32) {
    %c0_i32 = arith.constant 0 : i32
    %c0_i32_0 = arith.constant 0 : i32
    %c0_i32_1 = arith.constant 0 : i32
    return %c0_i32, %c0_i32_0 : i32, i32
  }
  func.func @transform_2(%arg0: i32) -> (i32, i32) {
    %c0_i32 = arith.constant 0 : i32
    %c0_i32_0 = arith.constant 0 : i32
    %c0_i32_1 = arith.constant 0 : i32
    return %c0_i32, %c0_i32_0 : i32, i32
  }
  func.func @transform_3(%arg0: i32) -> (i32, i32) {
    %c0_i32 = arith.constant 0 : i32
    %c0_i32_0 = arith.constant 0 : i32
    %c0_i32_1 = arith.constant 0 : i32
    return %c0_i32, %c0_i32_0 : i32, i32
  }
  func.func @transform_4(%arg0: i32) -> (i32, i32) {
    %c0_i32 = arith.constant 0 : i32
    %c0_i32_0 = arith.constant 0 : i32
    return %arg0, %c0_i32 : i32, i32
  }
  func.func @transform_5(%arg0: i32) -> (i32, i32) {
    %c0_i32 = arith.constant 0 : i32
    %c0_i32_0 = arith.constant 0 : i32
    %c0_i32_1 = arith.constant 0 : i32
    return %c0_i32, %c0_i32_0 : i32, i32
  }
}

</mosaic_0001>

<llo_original>
// kernel: facegrid_forward.3
$region0: #{facegrid_forward.3}
  #allocation0 [shape = 'u32[]', space=smem, size = 0x4, offset = 0x4, fixed_abs, tag = 'smem constant byte address 0x4 - core index']
  #allocation1 [shape = 'u32[144,128]{1,0:T(1,128)}', space=vmem, size = 0x12000, scoped, tag = 'internal scratch']
  %s0 = inlined_call_operand.vmem [shape: bf16[8,640], index: 0, kind: input, shape index: {}]
  %s1 = inlined_call_operand.hbm [shape: bf16[640,256], index: 1, kind: input, shape index: {}]
  %s2 = inlined_call_operand.vmem [shape: f32[3,256], index: 2, kind: input, shape index: {}]
  %s3 = inlined_call_operand.vmem [shape: f32[8,256], index: 3, kind: output, shape index: {0}]
  %s4 = inlined_call_operand.vmem [shape: f32[2,256], index: 4, kind: output, shape index: {1}]
  %5 = xla_tuple %s3, %s4
  %s6 = sld [smem:[#allocation0]]
  $region42: #{facegrid_forward.3} parent=0
    _
  %s8 = ssub.s32 1, %s6
  %s9 = scalar_select 0, %s8, %s6
  $region1: #{facegrid_forward.3} parent=0
    #allocation2 [shape = 'u8[327680]{0}', space=vmem, size = 0x50000, scoped, tag = 'input window, operand 1, single buffered']
    #allocation3 [shape = 's32[1]{0}', space=sflag, size = 0x4, scoped, tag = 'scoped memory for facegrid_forward.3']
    %10 = vsyncpa [#allocation3], 0
    // Predicated region
    $region2: #{facegrid_forward.3} parent=1 // pred_check
      _
    $region3: #{facegrid_forward.3} parent=1 // pred_check_branch
      %12 = sbr.rel (0) target = $region5
    $region4: #{facegrid_forward.3} parent=1 // pred_region
      _
    $region5: #{facegrid_forward.3} parent=1 // pred_fallthru
      _
    // Predicated region
    $region6: #{facegrid_forward.3} parent=1 // pred_check
      _
    $region7: #{facegrid_forward.3} parent=1 // pred_check_branch
      %14 = sbr.rel (0) target = $region9
    $region8: #{facegrid_forward.3} parent=1 // pred_region
      %s16 = ssub.s32 10240, 10240
      %17 = vsyncadd [#allocation3], %s16
      %s18 = sshll.u32 [#allocation2], 4
      %s19 = int_to_ptr.vmem [resolvable:$true] %s18
      %24 = dma.hbm_to_vmem [thread:$0]  %s1, 10240, %s19, [#allocation3], 128, 128, 8
    $region9: #{facegrid_forward.3} parent=1 // pred_fallthru
      _
    // Predicated region
    $region10: #{facegrid_forward.3} parent=1 // pred_check
      _
    $region11: #{facegrid_forward.3} parent=1 // pred_check_branch
      %26 = sbr.rel (0) target = $region13
    $region12: #{facegrid_forward.3} parent=1 // pred_region
      _
    $region13: #{facegrid_forward.3} parent=1 // pred_fallthru
      _
    // Predicated region
    $region14: #{facegrid_forward.3} parent=1 // pred_check
      _
    $region15: #{facegrid_forward.3} parent=1 // pred_check_branch
      %28 = sbr.rel (0) target = $region17
    $region16: #{facegrid_forward.3} parent=1 // pred_region
      %29 = dma.done [#allocation3], 10240
    $region17: #{facegrid_forward.3} parent=1 // pred_fallthru
      _
    %v31 = vld [vmem:[%s0] sm:$0xff]
    %v32 = vld [vmem:[%s0 + $0x8] sm:$0xff]
    %v33 = vld [vmem:[%s0 + $0x10] sm:$0xf]
    %v34 = vld [vmem:[#allocation2] sm:$0xff]
    %v35 = vld [vmem:[#allocation2 + $0x8] sm:$0xff]
    %v36 = vld [vmem:[#allocation2 + $0x10] sm:$0xff]
    %v37 = vld [vmem:[#allocation2 + $0x18] sm:$0xff]
    %v38 = vld [vmem:[#allocation2 + $0x20] sm:$0xff]
    %v39 = vld [vmem:[#allocation2 + $0x28] sm:$0xff]
    %v40 = vld [vmem:[#allocation2 + $0x30] sm:$0xff]
    %v41 = vld [vmem:[#allocation2 + $0x38] sm:$0xff]
    %v42 = vld [vmem:[#allocation2 + $0x40] sm:$0xff]
    %v43 = vld [vmem:[#allocation2 + $0x48] sm:$0xff]
    %v44 = vld [vmem:[#allocation2 + $0x50] sm:$0xff]
    %v45 = vld [vmem:[#allocation2 + $0x58] sm:$0xff]
    %v46 = vld [vmem:[#allocation2 + $0x60] sm:$0xff]
    %v47 = vld [vmem:[#allocation2 + $0x68] sm:$0xff]
    %v48 = vld [vmem:[#allocation2 + $0x70] sm:$0xff]
    %v49 = vld [vmem:[#allocation2 + $0x78] sm:$0xff]
    %v50 = vld [vmem:[#allocation2 + $0x80] sm:$0xff]
    %v51 = vld [vmem:[#allocation2 + $0x88] sm:$0xff]
    %v52 = vld [vmem:[#allocation2 + $0x90] sm:$0xff]
    %v53 = vld [vmem:[#allocation2 + $0x98] sm:$0xff]
    %v54 = vld [vmem:[#allocation2 + $0xa0] sm:$0xff]
    %v55 = vld [vmem:[#allocation2 + $0xa8] sm:$0xff]
    %v56 = vld [vmem:[#allocation2 + $0xb0] sm:$0xff]
    %v57 = vld [vmem:[#allocation2 + $0xb8] sm:$0xff]
    %v58 = vld [vmem:[#allocation2 + $0xc0] sm:$0xff]
    %v59 = vld [vmem:[#allocation2 + $0xc8] sm:$0xff]
    %v60 = vld [vmem:[#allocation2 + $0xd0] sm:$0xff]
    %v61 = vld [vmem:[#allocation2 + $0xd8] sm:$0xff]
    %v62 = vld [vmem:[#allocation2 + $0xe0] sm:$0xff]
    %v63 = vld [vmem:[#allocation2 + $0xe8] sm:$0xff]
    %v64 = vld [vmem:[#allocation2 + $0xf0] sm:$0xff]
    %v65 = vld [vmem:[#allocation2 + $0xf8] sm:$0xff]
    %v66 = vld [vmem:[#allocation2 + $0x100] sm:$0xff]
    %v67 = vld [vmem:[#allocation2 + $0x108] sm:$0xff]
    %v68 = vld [vmem:[#allocation2 + $0x110] sm:$0xff]
    %v69 = vld [vmem:[#allocation2 + $0x118] sm:$0xff]
    %v70 = vld [vmem:[#allocation2 + $0x120] sm:$0xff]
    %v71 = vld [vmem:[#allocation2 + $0x128] sm:$0xff]
    %v72 = vld [vmem:[#allocation2 + $0x130] sm:$0xff]
    %v73 = vld [vmem:[#allocation2 + $0x138] sm:$0xff]
    %v74 = vld [vmem:[#allocation2 + $0x140] sm:$0xff]
    %v75 = vld [vmem:[#allocation2 + $0x148] sm:$0xff]
    %v76 = vld [vmem:[#allocation2 + $0x150] sm:$0xff]
    %v77 = vld [vmem:[#allocation2 + $0x158] sm:$0xff]
    %v78 = vld [vmem:[#allocation2 + $0x160] sm:$0xff]
    %v79 = vld [vmem:[#allocation2 + $0x168] sm:$0xff]
    %v80 = vld [vmem:[#allocation2 + $0x170] sm:$0xff]
    %v81 = vld [vmem:[#allocation2 + $0x178] sm:$0xff]
    %v82 = vld [vmem:[#allocation2 + $0x180] sm:$0xff]
    %v83 = vld [vmem:[#allocation2 + $0x188] sm:$0xff]
    %v84 = vld [vmem:[#allocation2 + $0x190] sm:$0xff]
    %v85 = vld [vmem:[#allocation2 + $0x198] sm:$0xff]
    %v86 = vld [vmem:[#allocation2 + $0x1a0] sm:$0xff]
    %v87 = vld [vmem:[#allocation2 + $0x1a8] sm:$0xff]
    %v88 = vld [vmem:[#allocation2 + $0x1b0] sm:$0xff]
    %v89 = vld [vmem:[#allocation2 + $0x1b8] sm:$0xff]
    %v90 = vld [vmem:[#allocation2 + $0x1c0] sm:$0xff]
    %v91 = vld [vmem:[#allocation2 + $0x1c8] sm:$0xff]
    %v92 = vld [vmem:[#allocation2 + $0x1d0] sm:$0xff]
    %v93 = vld [vmem:[#allocation2 + $0x1d8] sm:$0xff]
    %v94 = vld [vmem:[#allocation2 + $0x1e0] sm:$0xff]
    %v95 = vld [vmem:[#allocation2 + $0x1e8] sm:$0xff]
    %v96 = vld [vmem:[#allocation2 + $0x1f0] sm:$0xff]
    %v97 = vld [vmem:[#allocation2 + $0x1f8] sm:$0xff]
    %v98 = vld [vmem:[#allocation2 + $0x200] sm:$0xff]
    %v99 = vld [vmem:[#allocation2 + $0x208] sm:$0xff]
    %v100 = vld [vmem:[#allocation2 + $0x210] sm:$0xff]
    %v101 = vld [vmem:[#allocation2 + $0x218] sm:$0xff]
    %v102 = vld [vmem:[#allocation2 + $0x220] sm:$0xff]
    %v103 = vld [vmem:[#allocation2 + $0x228] sm:$0xff]
    %v104 = vld [vmem:[#allocation2 + $0x230] sm:$0xff]
    %v105 = vld [vmem:[#allocation2 + $0x238] sm:$0xff]
    %v106 = vld [vmem:[#allocation2 + $0x240] sm:$0xff]
    %v107 = vld [vmem:[#allocation2 + $0x248] sm:$0xff]
    %v108 = vld [vmem:[#allocation2 + $0x250] sm:$0xff]
    %v109 = vld [vmem:[#allocation2 + $0x258] sm:$0xff]
    %v110 = vld [vmem:[#allocation2 + $0x260] sm:$0xff]
    %v111 = vld [vmem:[#allocation2 + $0x268] sm:$0xff]
    %v112 = vld [vmem:[#allocation2 + $0x270] sm:$0xff]
    %v113 = vld [vmem:[#allocation2 + $0x278] sm:$0xff]
    %v114 = vld [vmem:[%s2] ss:$4 sm:$0x3]
    %v116 = vlaneseq
    %v117 = vshrl.u32 %v116, 7
    %v118 = vsub.s32 0, %v117
    %v119 = vrot.slane %v114, %v118
    %v120 = vlaneseq
    %v121 = vshrl.u32 %v120, 7
    %v122 = vsub.s32 1, %v121
    %v123 = vrot.slane %v114, %v122
    %v129 = vunpack.c.l.b16 %v31
    %v130 = vunpack.c.h.b16 %v31
    %v131 = vunpack.c.l.b16 %v32
    %v132 = vunpack.c.h.b16 %v32
    %v133 = vunpack.c.l.b16 %v33
    %v134 = vpack.c.b16 %v129, %v129
    %v135 = vpack.c.b16 %v130, %v130
    %v136 = vpack.c.b16 %v131, %v131
    %v137 = vpack.c.b16 %v132, %v132
    %v138 = vpack.c.b16 %v133, %v133
    %v224 = vunpack.c.l.b16 %v34
    %v225 = vunpack.c.h.b16 %v34
    %v226 = vunpack.c.l.b16 %v35
    %v227 = vunpack.c.h.b16 %v35
    %v228 = vunpack.c.l.b16 %v36
    %v229 = vunpack.c.h.b16 %v36
    %v230 = vunpack.c.l.b16 %v37
    %v231 = vunpack.c.h.b16 %v37
    %v232 = vunpack.c.l.b16 %v38
    %v233 = vunpack.c.h.b16 %v38
    %v234 = vunpack.c.l.b16 %v39
    %v235 = vunpack.c.h.b16 %v39
    %v236 = vunpack.c.l.b16 %v40
    %v237 = vunpack.c.h.b16 %v40
    %v238 = vunpack.c.l.b16 %v41
    %v239 = vunpack.c.h.b16 %v41
    %v240 = vunpack.c.l.b16 %v42
    %v241 = vunpack.c.h.b16 %v42
    %v242 = vunpack.c.l.b16 %v43
    %v243 = vunpack.c.h.b16 %v43
    %v244 = vunpack.c.l.b16 %v44
    %v245 = vunpack.c.h.b16 %v44
    %v246 = vunpack.c.l.b16 %v45
    %v247 = vunpack.c.h.b16 %v45
    %v248 = vunpack.c.l.b16 %v46
    %v249 = vunpack.c.h.b16 %v46
    %v250 = vunpack.c.l.b16 %v47
    %v251 = vunpack.c.h.b16 %v47
    %v252 = vunpack.c.l.b16 %v48
    %v253 = vunpack.c.h.b16 %v48
    %v254 = vunpack.c.l.b16 %v49
    %v255 = vunpack.c.h.b16 %v49
    %v256 = vunpack.c.l.b16 %v50
    %v257 = vunpack.c.h.b16 %v50
    %v258 = vunpack.c.l.b16 %v51
    %v259 = vunpack.c.h.b16 %v51
    %v260 = vunpack.c.l.b16 %v52
    %v261 = vunpack.c.h.b16 %v52
    %v262 = vunpack.c.l.b16 %v53
    %v263 = vunpack.c.h.b16 %v53
    %v264 = vunpack.c.l.b16 %v54
    %v265 = vunpack.c.h.b16 %v54
    %v266 = vunpack.c.l.b16 %v55
    %v267 = vunpack.c.h.b16 %v55
    %v268 = vunpack.c.l.b16 %v56
    %v269 = vunpack.c.h.b16 %v56
    %v270 = vunpack.c.l.b16 %v57
    %v271 = vunpack.c.h.b16 %v57
    %v272 = vunpack.c.l.b16 %v58
    %v273 = vunpack.c.h.b16 %v58
    %v274 = vunpack.c.l.b16 %v59
    %v275 = vunpack.c.h.b16 %v59
    %v276 = vunpack.c.l.b16 %v60
    %v277 = vunpack.c.h.b16 %v60
    %v278 = vunpack.c.l.b16 %v61
    %v279 = vunpack.c.h.b16 %v61
    %v280 = vunpack.c.l.b16 %v62
    %v281 = vunpack.c.h.b16 %v62
    %v282 = vunpack.c.l.b16 %v63
    %v283 = vunpack.c.h.b16 %v63
    %v284 = vunpack.c.l.b16 %v64
    %v285 = vunpack.c.h.b16 %v64
    %v286 = vunpack.c.l.b16 %v65
    %v287 = vunpack.c.h.b16 %v65
    %v288 = vunpack.c.l.b16 %v66
    %v289 = vunpack.c.h.b16 %v66
    %v290 = vunpack.c.l.b16 %v67
    %v291 = vunpack.c.h.b16 %v67
    %v292 = vunpack.c.l.b16 %v68
    %v293 = vunpack.c.h.b16 %v68
    %v294 = vunpack.c.l.b16 %v69
    %v295 = vunpack.c.h.b16 %v69
    %v296 = vunpack.c.l.b16 %v70
    %v297 = vunpack.c.h.b16 %v70
    %v298 = vunpack.c.l.b16 %v71
    %v299 = vunpack.c.h.b16 %v71
    %v300 = vunpack.c.l.b16 %v72
    %v301 = vunpack.c.h.b16 %v72
    %v302 = vunpack.c.l.b16 %v73
    %v303 = vunpack.c.h.b16 %v73
    %v304 = vunpack.c.l.b16 %v74
    %v305 = vunpack.c.h.b16 %v74
    %v306 = vunpack.c.l.b16 %v75
    %v307 = vunpack.c.h.b16 %v75
    %v308 = vunpack.c.l.b16 %v76
    %v309 = vunpack.c.h.b16 %v76
    %v310 = vunpack.c.l.b16 %v77
    %v311 = vunpack.c.h.b16 %v77
    %v312 = vunpack.c.l.b16 %v78
    %v313 = vunpack.c.h.b16 %v78
    %v314 = vunpack.c.l.b16 %v79
    %v315 = vunpack.c.h.b16 %v79
    %v316 = vunpack.c.l.b16 %v80
    %v317 = vunpack.c.h.b16 %v80
    %v318 = vunpack.c.l.b16 %v81
    %v319 = vunpack.c.h.b16 %v81
    %v320 = vunpack.c.l.b16 %v82
    %v321 = vunpack.c.h.b16 %v82
    %v322 = vunpack.c.l.b16 %v83
    %v323 = vunpack.c.h.b16 %v83
    %v324 = vunpack.c.l.b16 %v84
    %v325 = vunpack.c.h.b16 %v84
    %v326 = vunpack.c.l.b16 %v85
    %v327 = vunpack.c.h.b16 %v85
    %v328 = vunpack.c.l.b16 %v86
    %v329 = vunpack.c.h.b16 %v86
    %v330 = vunpack.c.l.b16 %v87
    %v331 = vunpack.c.h.b16 %v87
    %v332 = vunpack.c.l.b16 %v88
    %v333 = vunpack.c.h.b16 %v88
    %v334 = vunpack.c.l.b16 %v89
    %v335 = vunpack.c.h.b16 %v89
    %v336 = vunpack.c.l.b16 %v90
    %v337 = vunpack.c.h.b16 %v90
    %v338 = vunpack.c.l.b16 %v91
    %v339 = vunpack.c.h.b16 %v91
    %v340 = vunpack.c.l.b16 %v92
    %v341 = vunpack.c.h.b16 %v92
    %v342 = vunpack.c.l.b16 %v93
    %v343 = vunpack.c.h.b16 %v93
    %v344 = vunpack.c.l.b16 %v94
    %v345 = vunpack.c.h.b16 %v94
    %v346 = vunpack.c.l.b16 %v95
    %v347 = vunpack.c.h.b16 %v95
    %v348 = vunpack.c.l.b16 %v96
    %v349 = vunpack.c.h.b16 %v96
    %v350 = vunpack.c.l.b16 %v97
    %v351 = vunpack.c.h.b16 %v97
    %v352 = vunpack.c.l.b16 %v98
    %v353 = vunpack.c.h.b16 %v98
    %v354 = vunpack.c.l.b16 %v99
    %v355 = vunpack.c.h.b16 %v99
    %v356 = vunpack.c.l.b16 %v100
    %v357 = vunpack.c.h.b16 %v100
    %v358 = vunpack.c.l.b16 %v101
    %v359 = vunpack.c.h.b16 %v101
    %v360 = vunpack.c.l.b16 %v102
    %v361 = vunpack.c.h.b16 %v102
    %v362 = vunpack.c.l.b16 %v103
    %v363 = vunpack.c.h.b16 %v103
    %v364 = vunpack.c.l.b16 %v104
    %v365 = vunpack.c.h.b16 %v104
    %v366 = vunpack.c.l.b16 %v105
    %v367 = vunpack.c.h.b16 %v105
    %v368 = vunpack.c.l.b16 %v106
    %v369 = vunpack.c.h.b16 %v106
    %v370 = vunpack.c.l.b16 %v107
    %v371 = vunpack.c.h.b16 %v107
    %v372 = vunpack.c.l.b16 %v108
    %v373 = vunpack.c.h.b16 %v108
    %v374 = vunpack.c.l.b16 %v109
    %v375 = vunpack.c.h.b16 %v109
    %v376 = vunpack.c.l.b16 %v110
    %v377 = vunpack.c.h.b16 %v110
    %v378 = vunpack.c.l.b16 %v111
    %v379 = vunpack.c.h.b16 %v111
    %v380 = vunpack.c.l.b16 %v112
    %v381 = vunpack.c.h.b16 %v112
    %v382 = vunpack.c.l.b16 %v113
    %v383 = vunpack.c.h.b16 %v113
    %v384 = vpack.c.b16 %v226, %v224
    %v385 = vpack.c.b16 %v227, %v225
    %v386 = vpack.c.b16 %v230, %v228
    %v387 = vpack.c.b16 %v231, %v229
    %v388 = vpack.c.b16 %v234, %v232
    %v389 = vpack.c.b16 %v235, %v233
    %v390 = vpack.c.b16 %v238, %v236
    %v391 = vpack.c.b16 %v239, %v237
    %v392 = vpack.c.b16 %v242, %v240
    %v393 = vpack.c.b16 %v243, %v241
    %v394 = vpack.c.b16 %v246, %v244
    %v395 = vpack.c.b16 %v247, %v245
    %v396 = vpack.c.b16 %v250, %v248
    %v397 = vpack.c.b16 %v251, %v249
    %v398 = vpack.c.b16 %v254, %v252
    %v399 = vpack.c.b16 %v255, %v253
    %v400 = vpack.c.b16 %v258, %v256
    %v401 = vpack.c.b16 %v259, %v257
    %v402 = vpack.c.b16 %v262, %v260
    %v403 = vpack.c.b16 %v263, %v261
    %v404 = vpack.c.b16 %v266, %v264
    %v405 = vpack.c.b16 %v267, %v265
    %v406 = vpack.c.b16 %v270, %v268
    %v407 = vpack.c.b16 %v271, %v269
    %v408 = vpack.c.b16 %v274, %v272
    %v409 = vpack.c.b16 %v275, %v273
    %v410 = vpack.c.b16 %v278, %v276
    %v411 = vpack.c.b16 %v279, %v277
    %v412 = vpack.c.b16 %v282, %v280
    %v413 = vpack.c.b16 %v283, %v281
    %v414 = vpack.c.b16 %v286, %v284
    %v415 = vpack.c.b16 %v287, %v285
    %v416 = vpack.c.b16 %v290, %v288
    %v417 = vpack.c.b16 %v291, %v289
    %v418 = vpack.c.b16 %v294, %v292
    %v419 = vpack.c.b16 %v295, %v293
    %v420 = vpack.c.b16 %v298, %v296
    %v421 = vpack.c.b16 %v299, %v297
    %v422 = vpack.c.b16 %v302, %v300
    %v423 = vpack.c.b16 %v303, %v301
    %v424 = vpack.c.b16 %v306, %v304
    %v425 = vpack.c.b16 %v307, %v305
    %v426 = vpack.c.b16 %v310, %v308
    %v427 = vpack.c.b16 %v311, %v309
    %v428 = vpack.c.b16 %v314, %v312
    %v429 = vpack.c.b16 %v315, %v313
    %v430 = vpack.c.b16 %v318, %v316
    %v431 = vpack.c.b16 %v319, %v317
    %v432 = vpack.c.b16 %v322, %v320
    %v433 = vpack.c.b16 %v323, %v321
    %v434 = vpack.c.b16 %v326, %v324
    %v435 = vpack.c.b16 %v327, %v325
    %v436 = vpack.c.b16 %v330, %v328
    %v437 = vpack.c.b16 %v331, %v329
    %v438 = vpack.c.b16 %v334, %v332
    %v439 = vpack.c.b16 %v335, %v333
    %v440 = vpack.c.b16 %v338, %v336
    %v441 = vpack.c.b16 %v339, %v337
    %v442 = vpack.c.b16 %v342, %v340
    %v443 = vpack.c.b16 %v343, %v341
    %v444 = vpack.c.b16 %v346, %v344
    %v445 = vpack.c.b16 %v347, %v345
    %v446 = vpack.c.b16 %v350, %v348
    %v447 = vpack.c.b16 %v351, %v349
    %v448 = vpack.c.b16 %v354, %v352
    %v449 = vpack.c.b16 %v355, %v353
    %v450 = vpack.c.b16 %v358, %v356
    %v451 = vpack.c.b16 %v359, %v357
    %v452 = vpack.c.b16 %v362, %v360
    %v453 = vpack.c.b16 %v363, %v361
    %v454 = vpack.c.b16 %v366, %v364
    %v455 = vpack.c.b16 %v367, %v365
    %v456 = vpack.c.b16 %v370, %v368
    %v457 = vpack.c.b16 %v371, %v369
    %v458 = vpack.c.b16 %v374, %v372
    %v459 = vpack.c.b16 %v375, %v373
    %v460 = vpack.c.b16 %v378, %v376
    %v461 = vpack.c.b16 %v379, %v377
    %v462 = vpack.c.b16 %v382, %v380
    %v463 = vpack.c.b16 %v383, %v381
    %544 = vmatprep.subr.bf16.mxu0 %v399
    %545 = vmatpush1.bf16.msra.mxu0 %v398
    %546 = vmatprep.subr.bf16.mxu0 %v397
    %547 = vmatpush1.bf16.msra.mxu0 %v396
    %548 = vmatprep.subr.bf16.mxu0 %v395
    %549 = vmatpush1.bf16.msra.mxu0 %v394
    %550 = vmatprep.subr.bf16.mxu0 %v393
    %551 = vmatpush1.bf16.msra.mxu0 %v392
    %552 = vmatprep.subr.bf16.mxu0 %v391
    %553 = vmatpush1.bf16.msra.mxu0 %v390
    %554 = vmatprep.subr.bf16.mxu0 %v389
    %555 = vmatpush1.bf16.msra.mxu0 %v388
    %556 = vmatprep.subr.bf16.mxu0 %v387
    %557 = vmatpush1.bf16.msra.mxu0 %v386
    %558 = vmatprep.subr.bf16.mxu0 %v385
    %559 = vmatpush1.bf16.msra.mxu0 %v384
    %560 = vmatprep.subr.bf16.mxu0 %v415
    %561 = vmatpush2.bf16.msra.mxu0 %v414
    %562 = vmatprep.subr.bf16.mxu0 %v413
    %563 = vmatpush2.bf16.msra.mxu0 %v412
    %564 = vmatprep.subr.bf16.mxu0 %v411
    %565 = vmatpush2.bf16.msra.mxu0 %v410
    %566 = vmatprep.subr.bf16.mxu0 %v409
    %567 = vmatpush2.bf16.msra.mxu0 %v408
    %568 = vmatprep.subr.bf16.mxu0 %v407
    %569 = vmatpush2.bf16.msra.mxu0 %v406
    %570 = vmatprep.subr.bf16.mxu0 %v405
    %571 = vmatpush2.bf16.msra.mxu0 %v404
    %572 = vmatprep.subr.bf16.mxu0 %v403
    %573 = vmatpush2.bf16.msra.mxu0 %v402
    %574 = vmatprep.subr.bf16.mxu0 %v401
    %575 = vmatpush2.bf16.msra.mxu0 %v400
    %576 = vmatprep.mubr.bf16.mxu0 %v135
    %577 = vmatmul.mubr.bf16.gmra.mxu0 %v134
    %v578 = vpop.f32.mrf.mxu0
    %v579 = vadd.f32 %v119, %v578
    %v580 = vpop.f32.mrf.mxu0
    %v581 = vadd.f32 %v123, %v580
    %v582 = vpop.f32.mrf.mxu0
    %v583 = vpop.f32.mrf.mxu0
    %584 = vdwg.mxu0
    %585 = vmatprep.subr.bf16.mxu0 %v431
    %586 = vmatpush1.bf16.msra.mxu0 %v430
    %587 = vmatprep.subr.bf16.mxu0 %v429
    %588 = vmatpush1.bf16.msra.mxu0 %v428
    %589 = vmatprep.subr.bf16.mxu0 %v427
    %590 = vmatpush1.bf16.msra.mxu0 %v426
    %591 = vmatprep.subr.bf16.mxu0 %v425
    %592 = vmatpush1.bf16.msra.mxu0 %v424
    %593 = vmatprep.subr.bf16.mxu0 %v423
    %594 = vmatpush1.bf16.msra.mxu0 %v422
    %595 = vmatprep.subr.bf16.mxu0 %v421
    %596 = vmatpush1.bf16.msra.mxu0 %v420
    %597 = vmatprep.subr.bf16.mxu0 %v419
    %598 = vmatpush1.bf16.msra.mxu0 %v418
    %599 = vmatprep.subr.bf16.mxu0 %v417
    %600 = vmatpush1.bf16.msra.mxu0 %v416
    %601 = vmatprep.subr.bf16.mxu0 %v447
    %602 = vmatpush2.bf16.msra.mxu0 %v446
    %603 = vmatprep.subr.bf16.mxu0 %v445
    %604 = vmatpush2.bf16.msra.mxu0 %v444
    %605 = vmatprep.subr.bf16.mxu0 %v443
    %606 = vmatpush2.bf16.msra.mxu0 %v442
    %607 = vmatprep.subr.bf16.mxu0 %v441
    %608 = vmatpush2.bf16.msra.mxu0 %v440
    %609 = vmatprep.subr.bf16.mxu0 %v439
    %610 = vmatpush2.bf16.msra.mxu0 %v438
    %611 = vmatprep.subr.bf16.mxu0 %v437
    %612 = vmatpush2.bf16.msra.mxu0 %v436
    %613 = vmatprep.subr.bf16.mxu0 %v435
    %614 = vmatpush2.bf16.msra.mxu0 %v434
    %615 = vmatprep.subr.bf16.mxu0 %v433
    %616 = vmatpush2.bf16.msra.mxu0 %v432
    %617 = vmatprep.mubr.bf16.mxu0 %v137
    %618 = vmatmul.mubr.bf16.gmra.mxu0 %v136
    %v619 = vpop.f32.mrf.mxu0
    %v620 = vadd.f32 %v579, %v619
    %v621 = vpop.f32.mrf.mxu0
    %v622 = vadd.f32 %v581, %v621
    %v623 = vpop.f32.mrf.mxu0
    %v624 = vpop.f32.mrf.mxu0
    %625 = vdwg.mxu0
    %626 = vmatprep.subr.bf16.mxu0 %v463
    %627 = vmatpush1.bf16.msra.mxu0 %v462
    %628 = vmatprep.subr.bf16.mxu0 %v461
    %629 = vmatpush1.bf16.msra.mxu0 %v460
    %630 = vmatprep.subr.bf16.mxu0 %v459
    %631 = vmatpush1.bf16.msra.mxu0 %v458
    %632 = vmatprep.subr.bf16.mxu0 %v457
    %633 = vmatpush1.bf16.msra.mxu0 %v456
    %634 = vmatprep.subr.bf16.mxu0 %v455
    %635 = vmatpush1.bf16.msra.mxu0 %v454
    %636 = vmatprep.subr.bf16.mxu0 %v453
    %637 = vmatpush1.bf16.msra.mxu0 %v452
    %638 = vmatprep.subr.bf16.mxu0 %v451
    %639 = vmatpush1.bf16.msra.mxu0 %v450
    %640 = vmatprep.subr.bf16.mxu0 %v449
    %641 = vmatpush1.bf16.msra.mxu0 %v448
    %642 = vmatprep.subr.bf16.mxu0 0
    %643 = vmatpush2.bf16.msra.mxu0 0
    %644 = vmatprep.subr.bf16.mxu0 0
    %645 = vmatpush2.bf16.msra.mxu0 0
    %646 = vmatprep.subr.bf16.mxu0 0
    %647 = vmatpush2.bf16.msra.mxu0 0
    %648 = vmatprep.subr.bf16.mxu0 0
    %649 = vmatpush2.bf16.msra.mxu0 0
    %650 = vmatprep.subr.bf16.mxu0 0
    %651 = vmatpush2.bf16.msra.mxu0 0
    %652 = vmatprep.subr.bf16.mxu0 0
    %653 = vmatpush2.bf16.msra.mxu0 0
    %654 = vmatprep.subr.bf16.mxu0 0
    %655 = vmatpush2.bf16.msra.mxu0 0
    %656 = vmatprep.subr.bf16.mxu0 0
    %657 = vmatpush2.bf16.msra.mxu0 0
    %658 = vmatprep.mubr.bf16.mxu0 0
    %659 = vmatmul.mubr.bf16.gmra.mxu0 %v138
    %v660 = vpop.f32.mrf.mxu0
    %v661 = vadd.f32 %v620, %v660
    %v662 = vpop.f32.mrf.mxu0
    %v663 = vadd.f32 %v622, %v662
    %v664 = vpop.f32.mrf.mxu0
    %v665 = vpop.f32.mrf.mxu0
    %666 = vdwg.mxu0
    %v667 = vmax.f32 %v661, 0.0
    %v668 = vmax.f32 %v663, 0.0
    %669 = vst [vmem:[%s3] sm:$0xff] %v667
    %670 = vst [vmem:[%s3 + $0x8] sm:$0xff] %v668
    %v671 = vrot.slane %v667, 4
    %v672 = vadd.f32 %v667, %v671
    %v673 = vrot.slane %v672, 2
    %v674 = vadd.f32 %v672, %v673
    %v675 = vrot.slane %v674, 1
    %v676 = vadd.f32 %v674, %v675
    %v677 = vrot.slane %v668, 4
    %v678 = vadd.f32 %v668, %v677
    %v679 = vrot.slane %v678, 2
    %v680 = vadd.f32 %v678, %v679
    %v681 = vrot.slane %v680, 1
    %v682 = vadd.f32 %v680, %v681
    %v683 = vmul.f32 %v667, %v667
    %v684 = vmul.f32 %v668, %v668
    %v685 = vrot.slane %v683, 4
    %v686 = vadd.f32 %v683, %v685
    %v687 = vrot.slane %v686, 2
    %v688 = vadd.f32 %v686, %v687
    %v689 = vrot.slane %v688, 1
    %v690 = vadd.f32 %v688, %v689
    %v691 = vrot.slane %v684, 4
    %v692 = vadd.f32 %v684, %v691
    %v693 = vrot.slane %v692, 2
    %v694 = vadd.f32 %v692, %v693
    %v695 = vrot.slane %v694, 1
    %v696 = vadd.f32 %v694, %v695
    %vm697 = vcmask 1040384
    %v698 = vsel %vm697, %v676, %v690
    %v699 = vsel %vm697, %v682, %v696
    %p700 = scmp.eq.s32.totalorder 0, 0
    // Predicated region
    $region18: #{facegrid_forward.3} parent=1 // pred_check
      %p701 = pneg %p700
    $region19: #{facegrid_forward.3} parent=1 // pred_check_branch
      %703 = sbr.rel (%p701) target = $region21
    $region20: #{facegrid_forward.3} parent=1 // pred_region
      %v706 = vcombine.low %v698, %v699
      %v708 = vunpack.c.l.s4 1983009808
      %v709 = vunpack.c.0.s8 %v708
      %v710 = vlaneseq
      %v711 = vshrl.u32 %v710, 7
      %v712 = vsub.s32 %v709, %v711
      %v713 = vrot.slane %v706, %v712
      %715 = vst [vmem:[%s4] sm:$0xf] %v713
    $region21: #{facegrid_forward.3} parent=1 // pred_fallthru
      _
    %p716 = scmp.gt.s32.totalorder 0, 0
    // Predicated region
    $region22: #{facegrid_forward.3} parent=1 // pred_check
      %p717 = pneg %p716
    $region23: #{facegrid_forward.3} parent=1 // pred_check_branch
      %719 = sbr.rel (%p717) target = $region25
    $region24: #{facegrid_forward.3} parent=1 // pred_region
      %v720 = vld [vmem:[%s4] sm:$0xf]
      %v723 = vcombine.low %v698, %v699
      %v725 = vunpack.c.l.s4 1983009808
      %v726 = vunpack.c.0.s8 %v725
      %v727 = vlaneseq
      %v728 = vshrl.u32 %v727, 7
      %v729 = vsub.s32 %v726, %v728
      %v730 = vrot.slane %v723, %v729
      %v732 = vadd.f32 %v720, %v730
      %733 = vst [vmem:[%s4] sm:$0xf] %v732
    $region25: #{facegrid_forward.3} parent=1 // pred_fallthru
      _
    // Predicated region
    $region26: #{facegrid_forward.3} parent=1 // pred_check
      _
    $region27: #{facegrid_forward.3} parent=1 // pred_check_branch
      %735 = sbr.rel (0) target = $region29
    $region28: #{facegrid_forward.3} parent=1 // pred_region
      _
    $region29: #{facegrid_forward.3} parent=1 // pred_fallthru
      _
    // Predicated region
    $region30: #{facegrid_forward.3} parent=1 // pred_check
      _
    $region31: #{facegrid_forward.3} parent=1 // pred_check_branch
      %737 = sbr.rel (0) target = $region33
    $region32: #{facegrid_forward.3} parent=1 // pred_region
      _
    $region33: #{facegrid_forward.3} parent=1 // pred_fallthru
      _
    // Predicated region
    $region34: #{facegrid_forward.3} parent=1 // pred_check
      _
    $region35: #{facegrid_forward.3} parent=1 // pred_check_branch
      %739 = sbr.rel (0) target = $region37
    $region36: #{facegrid_forward.3} parent=1 // pred_region
      _
    $region37: #{facegrid_forward.3} parent=1 // pred_fallthru
      _
    // Predicated region
    $region38: #{facegrid_forward.3} parent=1 // pred_check
      _
    $region39: #{facegrid_forward.3} parent=1 // pred_check_branch
      %741 = sbr.rel (0) target = $region41
    $region40: #{facegrid_forward.3} parent=1 // pred_region
      _
    $region41: #{facegrid_forward.3} parent=1 // pred_fallthru
      _
    %742 = vsyncpa [#allocation3], 1

// kernel: facegrid_forward.5
$region0: #{facegrid_forward.5}
  #allocation0 [shape = 'u32[]', space=smem, size = 0x4, offset = 0x4, fixed_abs, tag = 'smem constant byte address 0x4 - core index']
  #allocation1 [shape = 'u32[144,128]{1,0:T(1,128)}', space=vmem, size = 0x12000, scoped, tag = 'internal scratch']
  %s0 = inlined_call_operand.vmem [shape: f32[8,128], index: 0, kind: input, shape index: {}]
  %s1 = inlined_call_operand.vmem [shape: f32[2,128], index: 1, kind: input, shape index: {}]
  %s2 = inlined_call_operand.hbm [shape: f32[8,128], index: 2, kind: output, shape index: {}]
  %s3 = sld [smem:[#allocation0]]
  $region18: #{facegrid_forward.5} parent=0
    _
  %s5 = ssub.s32 1, %s3
  %s6 = scalar_select 0, %s5, %s3
  $region1: #{facegrid_forward.5} parent=0
    #allocation2 [shape = 'u8[4096]{0}', space=vmem, size = 0x1000, scoped, tag = 'output window, operand 0, single buffered']
    #allocation3 [shape = 's32[1]{0}', space=sflag, size = 0x4, scoped, tag = 'scoped memory for facegrid_forward.5']
    %7 = vsyncpa [#allocation3], 0
    // Predicated region
    $region2: #{facegrid_forward.5} parent=1 // pred_check
      _
    $region3: #{facegrid_forward.5} parent=1 // pred_check_branch
      %9 = sbr.rel (0) target = $region5
    $region4: #{facegrid_forward.5} parent=1 // pred_region
      _
    $region5: #{facegrid_forward.5} parent=1 // pred_fallthru
      _
    // Predicated region
    $region6: #{facegrid_forward.5} parent=1 // pred_check
      _
    $region7: #{facegrid_forward.5} parent=1 // pred_check_branch
      %11 = sbr.rel (0) target = $region9
    $region8: #{facegrid_forward.5} parent=1 // pred_region
      _
    $region9: #{facegrid_forward.5} parent=1 // pred_fallthru
      _
    %v12 = vld [vmem:[%s0] sm:$0xff]
    %v13 = vld [vmem:[%s1] sm:$0x1]
    %v14 = vlaneseq
    %v15 = vshrl.u32 %v14, 7
    %v16 = vsub.s32 0, %v15
    %v17 = vrot.slane %v13, %v16
    %v18 = vmul.f32 %v12, %v17
    %v19 = vld [vmem:[%s1 + $0x1] sm:$0x1]
    %v20 = vlaneseq
    %v21 = vshrl.u32 %v20, 7
    %v22 = vsub.s32 0, %v21
    %v23 = vrot.slane %v19, %v22
    %v24 = vadd.f32 %v18, %v23
    %25 = vst [vmem:[#allocation2] sm:$0xff] %v24
    // Predicated region
    $region10: #{facegrid_forward.5} parent=1 // pred_check
      _
    $region11: #{facegrid_forward.5} parent=1 // pred_check_branch
      %27 = sbr.rel (0) target = $region13
    $region12: #{facegrid_forward.5} parent=1 // pred_region
      %s29 = ssub.s32 128, 128
      %30 = vsyncadd [#allocation3], %s29
      %s32 = sshll.u32 [#allocation2], 4
      %s33 = int_to_ptr.vmem [resolvable:$true] %s32
      %35 = dma.vmem_to_hbm [thread:$0]  %s33, 128, %s2, [#allocation3]
    $region13: #{facegrid_forward.5} parent=1 // pred_fallthru
      _
    // Predicated region
    $region14: #{facegrid_forward.5} parent=1 // pred_check
      _
    $region15: #{facegrid_forward.5} parent=1 // pred_check_branch
      %37 = sbr.rel (0) target = $region17
    $region16: #{facegrid_forward.5} parent=1 // pred_region
      %38 = dma.done [#allocation3], 128
    $region17: #{facegrid_forward.5} parent=1 // pred_fallthru
      _
    %39 = vsyncpa [#allocation3], 1

// kernel: facegrid_forward.4
$region0: #{facegrid_forward.4}
  #allocation0 [shape = 'u32[]', space=smem, size = 0x4, offset = 0x4, fixed_abs, tag = 'smem constant byte address 0x4 - core index']
  #allocation1 [shape = 'u32[144,128]{1,0:T(1,128)}', space=vmem, size = 0x12000, scoped, tag = 'internal scratch']
  %s0 = inlined_call_operand.vmem [shape: f32[8,256], index: 0, kind: input, shape index: {}]
  %s1 = inlined_call_operand.vmem [shape: bf16[256,128], index: 1, kind: input, shape index: {}]
  %s2 = inlined_call_operand.vmem [shape: f32[2,256], index: 2, kind: input, shape index: {}]
  %s3 = inlined_call_operand.vmem [shape: f32[3,128], index: 3, kind: input, shape index: {}]
  %s4 = inlined_call_operand.vmem [shape: f32[8,128], index: 4, kind: output, shape index: {0}]
  %s5 = inlined_call_operand.vmem [shape: f32[2,128], index: 5, kind: output, shape index: {1}]
  %6 = xla_tuple %s4, %s5
  %s7 = sld [smem:[#allocation0]]
  $region42: #{facegrid_forward.4} parent=0
    _
  %s9 = ssub.s32 1, %s7
  %s10 = scalar_select 0, %s9, %s7
  // Predicated region
  $region2: #{facegrid_forward.4} parent=0 // pred_check
    _
  $region3: #{facegrid_forward.4} parent=0 // pred_check_branch
    %12 = sbr.rel (0) target = $region5
  $region4: #{facegrid_forward.4} parent=0 // pred_region
    _
  $region5: #{facegrid_forward.4} parent=0 // pred_fallthru
    _
  // Predicated region
  $region6: #{facegrid_forward.4} parent=0 // pred_check
    _
  $region7: #{facegrid_forward.4} parent=0 // pred_check_branch
    %14 = sbr.rel (0) target = $region9
  $region8: #{facegrid_forward.4} parent=0 // pred_region
    _
  $region9: #{facegrid_forward.4} parent=0 // pred_fallthru
    _
  // Predicated region
  $region10: #{facegrid_forward.4} parent=0 // pred_check
    _
  $region11: #{facegrid_forward.4} parent=0 // pred_check_branch
    %16 = sbr.rel (0) target = $region13
  $region12: #{facegrid_forward.4} parent=0 // pred_region
    _
  $region13: #{facegrid_forward.4} parent=0 // pred_fallthru
    _
  // Predicated region
  $region14: #{facegrid_forward.4} parent=0 // pred_check
    _
  $region15: #{facegrid_forward.4} parent=0 // pred_check_branch
    %18 = sbr.rel (0) target = $region17
  $region16: #{facegrid_forward.4} parent=0 // pred_region
    _
  $region17: #{facegrid_forward.4} parent=0 // pred_fallthru
    _
  %v20 = vld [vmem:[%s0] sm:$0xff]
  %v21 = vld [vmem:[%s0 + $0x8] sm:$0xff]
  %v22 = vld [vmem:[%s2] ss:$2 sm:$0x3]
  %v24 = vlaneseq
  %v25 = vshrl.u32 %v24, 7
  %v26 = vsub.s32 0, %v25
  %v27 = vrot.slane %v22, %v26
  %v28 = vlaneseq
  %v29 = vshrl.u32 %v28, 7
  %v30 = vsub.s32 1, %v29
  %v31 = vrot.slane %v22, %v30
  %v34 = vmul.f32 %v20, %v27
  %v35 = vmul.f32 %v21, %v31
  %s36 = scalar_lea.vmem %s2, 1
  %v37 = vld [vmem:[%s36] ss:$2 sm:$0x3]
  %v39 = vlaneseq
  %v40 = vshrl.u32 %v39, 7
  %v41 = vsub.s32 0, %v40
  %v42 = vrot.slane %v37, %v41
  %v43 = vlaneseq
  %v44 = vshrl.u32 %v43, 7
  %v45 = vsub.s32 1, %v44
  %v46 = vrot.slane %v37, %v45
  %v49 = vadd.f32 %v34, %v42
  %v50 = vadd.f32 %v35, %v46
  %v51 = vpack.c.bf16 %v49, %v49
  %v52 = vpack.c.bf16 %v50, %v50
  %v53 = vld [vmem:[%s1] sm:$0xf]
  %v54 = vld [vmem:[%s1 + $0x4] sm:$0xf]
  %v55 = vld [vmem:[%s1 + $0x8] sm:$0xf]
  %v56 = vld [vmem:[%s1 + $0xc] sm:$0xf]
  %v57 = vld [vmem:[%s1 + $0x10] sm:$0xf]
  %v58 = vld [vmem:[%s1 + $0x14] sm:$0xf]
  %v59 = vld [vmem:[%s1 + $0x18] sm:$0xf]
  %v60 = vld [vmem:[%s1 + $0x1c] sm:$0xf]
  %v61 = vld [vmem:[%s1 + $0x20] sm:$0xf]
  %v62 = vld [vmem:[%s1 + $0x24] sm:$0xf]
  %v63 = vld [vmem:[%s1 + $0x28] sm:$0xf]
  %v64 = vld [vmem:[%s1 + $0x2c] sm:$0xf]
  %v65 = vld [vmem:[%s1 + $0x30] sm:$0xf]
  %v66 = vld [vmem:[%s1 + $0x34] sm:$0xf]
  %v67 = vld [vmem:[%s1 + $0x38] sm:$0xf]
  %v68 = vld [vmem:[%s1 + $0x3c] sm:$0xf]
  %v69 = vld [vmem:[%s1 + $0x40] sm:$0xf]
  %v70 = vld [vmem:[%s1 + $0x44] sm:$0xf]
  %v71 = vld [vmem:[%s1 + $0x48] sm:$0xf]
  %v72 = vld [vmem:[%s1 + $0x4c] sm:$0xf]
  %v73 = vld [vmem:[%s1 + $0x50] sm:$0xf]
  %v74 = vld [vmem:[%s1 + $0x54] sm:$0xf]
  %v75 = vld [vmem:[%s1 + $0x58] sm:$0xf]
  %v76 = vld [vmem:[%s1 + $0x5c] sm:$0xf]
  %v77 = vld [vmem:[%s1 + $0x60] sm:$0xf]
  %v78 = vld [vmem:[%s1 + $0x64] sm:$0xf]
  %v79 = vld [vmem:[%s1 + $0x68] sm:$0xf]
  %v80 = vld [vmem:[%s1 + $0x6c] sm:$0xf]
  %v81 = vld [vmem:[%s1 + $0x70] sm:$0xf]
  %v82 = vld [vmem:[%s1 + $0x74] sm:$0xf]
  %v83 = vld [vmem:[%s1 + $0x78] sm:$0xf]
  %v84 = vld [vmem:[%s1 + $0x7c] sm:$0xf]
  %v85 = vld [vmem:[%s3] sm:$0x1]
  %v86 = vlaneseq
  %v87 = vshrl.u32 %v86, 7
  %v88 = vsub.s32 0, %v87
  %v89 = vrot.slane %v85, %v88
  %v122 = vunpack.c.l.b16 %v53
  %v123 = vunpack.c.l.b16 %v54
  %v124 = vunpack.c.l.b16 %v55
  %v125 = vunpack.c.l.b16 %v56
  %v126 = vunpack.c.l.b16 %v57
  %v127 = vunpack.c.l.b16 %v58
  %v128 = vunpack.c.l.b16 %v59
  %v129 = vunpack.c.l.b16 %v60
  %v130 = vunpack.c.l.b16 %v61
  %v131 = vunpack.c.l.b16 %v62
  %v132 = vunpack.c.l.b16 %v63
  %v133 = vunpack.c.l.b16 %v64
  %v134 = vunpack.c.l.b16 %v65
  %v135 = vunpack.c.l.b16 %v66
  %v136 = vunpack.c.l.b16 %v67
  %v137 = vunpack.c.l.b16 %v68
  %v138 = vunpack.c.l.b16 %v69
  %v139 = vunpack.c.l.b16 %v70
  %v140 = vunpack.c.l.b16 %v71
  %v141 = vunpack.c.l.b16 %v72
  %v142 = vunpack.c.l.b16 %v73
  %v143 = vunpack.c.l.b16 %v74
  %v144 = vunpack.c.l.b16 %v75
  %v145 = vunpack.c.l.b16 %v76
  %v146 = vunpack.c.l.b16 %v77
  %v147 = vunpack.c.l.b16 %v78
  %v148 = vunpack.c.l.b16 %v79
  %v149 = vunpack.c.l.b16 %v80
  %v150 = vunpack.c.l.b16 %v81
  %v151 = vunpack.c.l.b16 %v82
  %v152 = vunpack.c.l.b16 %v83
  %v153 = vunpack.c.l.b16 %v84
  %v154 = vpack.c.b16 %v123, %v122
  %v155 = vpack.c.b16 %v125, %v124
  %v156 = vpack.c.b16 %v127, %v126
  %v157 = vpack.c.b16 %v129, %v128
  %v158 = vpack.c.b16 %v131, %v130
  %v159 = vpack.c.b16 %v133, %v132
  %v160 = vpack.c.b16 %v135, %v134
  %v161 = vpack.c.b16 %v137, %v136
  %v162 = vpack.c.b16 %v139, %v138
  %v163 = vpack.c.b16 %v141, %v140
  %v164 = vpack.c.b16 %v143, %v142
  %v165 = vpack.c.b16 %v145, %v144
  %v166 = vpack.c.b16 %v147, %v146
  %v167 = vpack.c.b16 %v149, %v148
  %v168 = vpack.c.b16 %v151, %v150
  %v169 = vpack.c.b16 %v153, %v152
  %186 = vmatprep.subr.bf16.mxu0 0
  %187 = vmatpush1.bf16.msra.mxu0 %v161
  %188 = vmatprep.subr.bf16.mxu0 0
  %189 = vmatpush1.bf16.msra.mxu0 %v160
  %190 = vmatprep.subr.bf16.mxu0 0
  %191 = vmatpush1.bf16.msra.mxu0 %v159
  %192 = vmatprep.subr.bf16.mxu0 0
  %193 = vmatpush1.bf16.msra.mxu0 %v158
  %194 = vmatprep.subr.bf16.mxu0 0
  %195 = vmatpush1.bf16.msra.mxu0 %v157
  %196 = vmatprep.subr.bf16.mxu0 0
  %197 = vmatpush1.bf16.msra.mxu0 %v156
  %198 = vmatprep.subr.bf16.mxu0 0
  %199 = vmatpush1.bf16.msra.mxu0 %v155
  %200 = vmatprep.subr.bf16.mxu0 0
  %201 = vmatpush1.bf16.msra.mxu0 %v154
  %202 = vmatprep.subr.bf16.mxu0 0
  %203 = vmatpush2.bf16.msra.mxu0 %v169
  %204 = vmatprep.subr.bf16.mxu0 0
  %205 = vmatpush2.bf16.msra.mxu0 %v168
  %206 = vmatprep.subr.bf16.mxu0 0
  %207 = vmatpush2.bf16.msra.mxu0 %v167
  %208 = vmatprep.subr.bf16.mxu0 0
  %209 = vmatpush2.bf16.msra.mxu0 %v166
  %210 = vmatprep.subr.bf16.mxu0 0
  %211 = vmatpush2.bf16.msra.mxu0 %v165
  %212 = vmatprep.subr.bf16.mxu0 0
  %213 = vmatpush2.bf16.msra.mxu0 %v164
  %214 = vmatprep.subr.bf16.mxu0 0
  %215 = vmatpush2.bf16.msra.mxu0 %v163
  %216 = vmatprep.subr.bf16.mxu0 0
  %217 = vmatpush2.bf16.msra.mxu0 %v162
  %218 = vmatprep.mubr.bf16.mxu0 %v52
  %219 = vmatmul.mubr.bf16.gmra.mxu0 %v51
  %v220 = vpop.f32.mrf.mxu0
  %v221 = vadd.f32 %v89, %v220
  %v222 = vpop.f32.mrf.mxu0
  %v223 = vpop.f32.mrf.mxu0
  %v224 = vpop.f32.mrf.mxu0
  %225 = vdwg.mxu0
  %v226 = vmax.f32 %v221, 0.0
  %227 = vst [vmem:[%s4] sm:$0xff] %v226
  %v228 = vrot.slane %v226, 4
  %v229 = vadd.f32 %v226, %v228
  %v230 = vrot.slane %v229, 2
  %v231 = vadd.f32 %v229, %v230
  %v232 = vrot.slane %v231, 1
  %v233 = vadd.f32 %v231, %v232
  %v234 = vmul.f32 %v226, %v226
  %v235 = vrot.slane %v234, 4
  %v236 = vadd.f32 %v234, %v235
  %v237 = vrot.slane %v236, 2
  %v238 = vadd.f32 %v236, %v237
  %v239 = vrot.slane %v238, 1
  %v240 = vadd.f32 %v238, %v239
  %vm241 = vcmask 1040384
  %v242 = vsel %vm241, %v233, %v240
  %p243 = scmp.eq.s32.totalorder 0, 0
  // Predicated region
  $region18: #{facegrid_forward.4} parent=0 // pred_check
    %p244 = pneg %p243
  $region19: #{facegrid_forward.4} parent=0 // pred_check_branch
    %246 = sbr.rel (%p244) target = $region21
  $region20: #{facegrid_forward.4} parent=0 // pred_region
    %247 = vst [vmem:[%s5] sm:$0x3] %v242
  $region21: #{facegrid_forward.4} parent=0 // pred_fallthru
    _
  %p248 = scmp.gt.s32.totalorder 0, 0
  // Predicated region
  $region22: #{facegrid_forward.4} parent=0 // pred_check
    %p249 = pneg %p248
  $region23: #{facegrid_forward.4} parent=0 // pred_check_branch
    %251 = sbr.rel (%p249) target = $region25
  $region24: #{facegrid_forward.4} parent=0 // pred_region
    %v252 = vld [vmem:[%s5] sm:$0x3]
    %v253 = vadd.f32 %v252, %v242
    %254 = vst [vmem:[%s5] sm:$0x3] %v253
  $region25: #{facegrid_forward.4} parent=0 // pred_fallthru
    _
  // Predicated region
  $region26: #{facegrid_forward.4} parent=0 // pred_check
    _
  $region27: #{facegrid_forward.4} parent=0 // pred_check_branch
    %256 = sbr.rel (0) target = $region29
  $region28: #{facegrid_forward.4} parent=0 // pred_region
    _
  $region29: #{facegrid_forward.4} parent=0 // pred_fallthru
    _
  // Predicated region
  $region30: #{facegrid_forward.4} parent=0 // pred_check
    _
  $region31: #{facegrid_forward.4} parent=0 // pred_check_branch
    %258 = sbr.rel (0) target = $region33
  $region32: #{facegrid_forward.4} parent=0 // pred_region
    _
  $region33: #{facegrid_forward.4} parent=0 // pred_fallthru
    _
  // Predicated region
  $region34: #{facegrid_forward.4} parent=0 // pred_check
    _
  $region35: #{facegrid_forward.4} parent=0 // pred_check_branch
    %260 = sbr.rel (0) target = $region37
  $region36: #{facegrid_forward.4} parent=0 // pred_region
    _
  $region37: #{facegrid_forward.4} parent=0 // pred_fallthru
    _
  // Predicated region
  $region38: #{facegrid_forward.4} parent=0 // pred_check
    _
  $region39: #{facegrid_forward.4} parent=0 // pred_check_branch
    %262 = sbr.rel (0) target = $region41
  $region40: #{facegrid_forward.4} parent=0 // pred_region
    _
  $region41: #{facegrid_forward.4} parent=0 // pred_fallthru
    _

</llo_original>
